<compile_context>
chip_gen: v6e
topology: v6e:2x2x1
jax: 0.10.0
libtpu: 0.0.40
codegen_flags: <defaults>
</compile_context>

<pallas_src>
import functools

import jax
import jax.numpy as jnp
from jax.experimental import pallas as pl
from jax.experimental.pallas import tpu as pltpu


def _round_up(a, b):
    return (a + b - 1) // b * b


def _conv_block_kernel(x_ref, lo_ref, hi_ref, w_ref, b_ref, o_ref, *, ksize, pad):
    """One (TILE_L, C) sequence tile: depthwise conv + folded-BN bias + swish.

    x_ref  : (TILE_L, C)       current sequence tile
    lo_ref : (max(pad,1), C)   rows just before the tile (zeros at sequence start)
    hi_ref : (max(pad,1), C)   rows just after the tile  (zeros at sequence end)
    w_ref  : (K, C)            BN-folded depthwise taps:  w * gamma * rsqrt(var+eps)
    b_ref  : (1, C)            BN-folded bias:            beta - mean * gamma * rsqrt(var+eps)
    o_ref  : (TILE_L, C)
    """
    xt = x_ref[...].astype(jnp.float32)
    w = w_ref[...].astype(jnp.float32)          # single hoisted load of all taps
    tl = xt.shape[0]

    if pad > 0:
        window = jnp.concatenate(
            [lo_ref[...].astype(jnp.float32), xt, hi_ref[...].astype(jnp.float32)],
            axis=0)                              # (TILE_L + 2*pad, C)
    else:
        window = xt

    # Depthwise "SAME" conv: K shifted FMAs along the sublane (sequence) axis.
    acc = window[0:tl, :] * w[0:1, :]            # k = 0 initializes (no zeros+add)
    for k in range(1, ksize):                    # K is small & static -> unrolled
        acc = acc + window[k:k + tl, :] * w[k:k + 1, :]

    y = acc + b_ref[...].astype(jnp.float32)     # BatchNorm (folded, running stats)
    y = y * jax.nn.sigmoid(y)                    # swish / SiLU
    # Dropout(p=0.5) is identity in eval mode.
    o_ref[...] = y.astype(o_ref.dtype)


def convolution_block(x, weight, gamma, beta, running_mean, running_var, *,
                      kernel_size, eps=1e-5, tile_l=None,
                      vmem_limit_bytes=32 * 1024 * 1024):
    """Fused eval-mode ConvolutionBlock forward.

    x      : (L, C)  activations (sequence-major; channels on the lane axis)
    weight : (C, K)  depthwise Conv1d weight (PyTorch (C, 1, K) squeezed)
    gamma, beta, running_mean, running_var : (C,) BatchNorm1d params / stats
    """
    L, C = x.shape
    K = int(kernel_size)
    assert (K - 1) % 2 == 0, "kernel size should be an odd number for 'SAME'"
    assert weight.shape == (C, K)
    pad = (K - 1) // 2

    # ---- tile selection: multiple of 8 sublanes, sized so double-buffered f32
    # in+out tiles stay well inside v7x's 64 MiB VMEM. ---------------------------
    if tile_l is None:
        budget_rows = max(8, (8 * 1024 * 1024) // (4 * 4 * max(C, 1)))
        tile_l = min(512, budget_rows)
    tile_l = max(8, _round_up(int(tile_l), 8))
    tile_l = min(tile_l, _round_up(L, 8))
    tile_l = max(tile_l, _round_up(max(pad, 1), 8))   # a tile must cover its halo
    n_tiles = -(-L // tile_l)
    Lp = n_tiles * tile_l

    xq = x if Lp == L else jnp.pad(x, ((0, Lp - L), (0, 0)))

    # ---- per-tile halo rows (tiny gathers instead of a full padded copy of x). --
    pe = max(pad, 1)   # keep a non-empty halo block even for K == 1
    if pad > 0 and n_tiles > 1:
        t_idx = jnp.arange(1, n_tiles, dtype=jnp.int32)[:, None] * tile_l
        j_idx = jnp.arange(pad, dtype=jnp.int32)[None, :]
        lo = jnp.take(xq, (t_idx - pad + j_idx).reshape(-1), axis=0)
        hi = jnp.take(xq, (t_idx + j_idx).reshape(-1), axis=0)
        halo_lo = jnp.concatenate(
            [jnp.zeros((1, pad, C), x.dtype), lo.reshape(n_tiles - 1, pad, C)], axis=0)
        halo_hi = jnp.concatenate(
            [hi.reshape(n_tiles - 1, pad, C), jnp.zeros((1, pad, C), x.dtype)], axis=0)
    else:
        halo_lo = jnp.zeros((n_tiles, pe, C), x.dtype)
        halo_hi = jnp.zeros((n_tiles, pe, C), x.dtype)

    # ---- fold BatchNorm (eval) into the conv taps + a per-channel bias. ---------
    f32 = jnp.float32
    inv_std = jax.lax.rsqrt(running_var.astype(f32) + eps)
    scale = gamma.astype(f32) * inv_std                                  # (C,)
    w_eff = weight.astype(f32).T * scale[None, :]                        # (K, C)
    bias = (beta.astype(f32) - running_mean.astype(f32) * scale).reshape(1, C)

    kernel = functools.partial(_conv_block_kernel, ksize=K, pad=pad)
    itemsize = jnp.dtype(x.dtype).itemsize
    cost = pl.CostEstimate(
        flops=(2 * K + 6) * Lp * C,
        transcendentals=Lp * C,
        bytes_accessed=(2 * Lp * C + 2 * n_tiles * pe * C) * itemsize + (K + 1) * C * 4,
    )

    out = pl.pallas_call(
        kernel,
        out_shape=jax.ShapeDtypeStruct((Lp, C), x.dtype),
        grid=(n_tiles,),
        in_specs=[
            pl.BlockSpec((tile_l, C), lambda i: (i, 0)),       # sequence tile
            pl.BlockSpec((None, pe, C), lambda i: (i, 0, 0)),  # halo before
            pl.BlockSpec((None, pe, C), lambda i: (i, 0, 0)),  # halo after
            pl.BlockSpec((K, C), lambda i: (0, 0)),            # folded taps
            pl.BlockSpec((1, C), lambda i: (0, 0)),            # folded bias
        ],
        out_specs=pl.BlockSpec((tile_l, C), lambda i: (i, 0)),
        compiler_params=pltpu.CompilerParams(
            dimension_semantics=("parallel",),
            vmem_limit_bytes=vmem_limit_bytes,
        ),
        cost_estimate=cost,
    )(xq, halo_lo, halo_hi, w_eff, bias)

    return out if Lp == L else out[:L]


def _reference(x, weight, gamma, beta, mean, var, *, kernel_size, eps=1e-5):
    """Pure-JAX eval-mode reference matching the PyTorch module."""
    L, C = x.shape
    K = kernel_size
    pad = (K - 1) // 2
    xpad = jnp.pad(x.astype(jnp.float32), ((pad, pad), (0, 0)))
    cols = jnp.stack([xpad[k:k + L, :] for k in range(K)], axis=0)       # (K, L, C)
    conv = jnp.einsum("klc,ck->lc", cols, weight.astype(jnp.float32))    # cross-correlation
    inv_std = jax.lax.rsqrt(var.astype(jnp.float32) + eps)
    y = (conv - mean.astype(jnp.float32)) * inv_std * gamma.astype(jnp.float32) \
        + beta.astype(jnp.float32)
    return (y * jax.nn.sigmoid(y)).astype(x.dtype)


if __name__ == "__main__":
    key = jax.random.PRNGKey(0)
    L, C, K = 64, 32, 5                    # small shapes; tile_l=16 -> 4 tiles, halos exercised
    kx, kw, kg, kb = jax.random.split(key, 4)

    x = jax.random.normal(kx, (L, C), jnp.float32)
    # Depthwise Conv1d weight: PyTorch shape (C, 1, K); stored here as (C, K).
    weight = 0.1 * jax.random.normal(kw, (C, K), jnp.float32)
    gamma = 1.0 + 0.1 * jax.random.normal(kg, (C,), jnp.float32)
    beta = 0.1 * jax.random.normal(kb, (C,), jnp.float32)
    running_mean = 0.05 * jnp.arange(C, dtype=jnp.float32) / C
    running_var = jnp.ones((C,), jnp.float32)

    out = convolution_block(x, weight, gamma, beta, running_mean, running_var,
                            kernel_size=K, tile_l=16)
    jax.block_until_ready(out)
    assert out.shape == (L, C) and out.dtype == x.dtype

    ref = _reference(x, weight, gamma, beta, running_mean, running_var, kernel_size=K)
    assert jnp.allclose(out, ref, atol=1e-4, rtol=1e-4), \
        float(jnp.max(jnp.abs(out - ref)))

    print("KERNEL_OK")
</pallas_src>

<mosaic_0001>
module attributes {stable_mosaic.version = 11 : i64} {
  func.func @_conv_block_kernel(%arg0: i32, %arg1: memref<16x32xf32, #tpu.memory_space<vmem>>, %arg2: memref<1x2x32xf32, #tpu.memory_space<vmem>>, %arg3: memref<1x2x32xf32, #tpu.memory_space<vmem>>, %arg4: memref<5x32xf32, #tpu.memory_space<vmem>>, %arg5: memref<1x32xf32, #tpu.memory_space<vmem>>, %arg6: memref<16x32xf32, #tpu.memory_space<vmem>>) attributes {dimension_semantics = [#tpu.dimension_semantics<parallel>], iteration_bounds = array<i64: 4>, scalar_prefetch = 0 : i64, scratch_operands = 0 : i64, tpu.core_type = #tpu.core_type<tc>, window_params = [{transform_indices = @transform_0, window_bounds = array<i64: 16, 32>}, {transform_indices = @transform_1, window_bounds = array<i64: 1, 2, 32>}, {transform_indices = @transform_2, window_bounds = array<i64: 1, 2, 32>}, {pipeline_mode = #tpu.pipeline_mode<synchronous>, transform_indices = @transform_3, window_bounds = array<i64: 5, 32>}, {pipeline_mode = #tpu.pipeline_mode<synchronous>, transform_indices = @transform_4, window_bounds = array<i64: 1, 32>}, {transform_indices = @transform_5, window_bounds = array<i64: 16, 32>}]} {
    %c0 = arith.constant 0 : index
    %c0_0 = arith.constant 0 : index
    %0 = vector.load %arg1[%c0, %c0_0] : memref<16x32xf32, #tpu.memory_space<vmem>>, vector<16x32xf32>
    %c0_1 = arith.constant 0 : index
    %c0_2 = arith.constant 0 : index
    %1 = vector.load %arg4[%c0_1, %c0_2] : memref<5x32xf32, #tpu.memory_space<vmem>>, vector<5x32xf32>
    %c0_3 = arith.constant 0 : index
    %c0_4 = arith.constant 0 : index
    %c0_5 = arith.constant 0 : index
    %2 = vector.load %arg2[%c0_3, %c0_4, %c0_5] : memref<1x2x32xf32, #tpu.memory_space<vmem>>, vector<1x2x32xf32>
    %3 = vector.shape_cast %2 : vector<1x2x32xf32> to vector<2x32xf32>
    %c0_6 = arith.constant 0 : index
    %c0_7 = arith.constant 0 : index
    %c0_8 = arith.constant 0 : index
    %4 = vector.load %arg3[%c0_6, %c0_7, %c0_8] : memref<1x2x32xf32, #tpu.memory_space<vmem>>, vector<1x2x32xf32>
    %5 = vector.shape_cast %4 : vector<1x2x32xf32> to vector<2x32xf32>
    %6 = tpu.concatenate %3, %0, %5 in 0 : vector<2x32xf32>, vector<16x32xf32>, vector<2x32xf32> -> vector<20x32xf32>
    %7 = vector.extract_strided_slice %6 {offsets = [0, 0], sizes = [16, 32], strides = [1, 1]} : vector<20x32xf32> to vector<16x32xf32>
    %8 = vector.extract_strided_slice %1 {offsets = [0, 0], sizes = [1, 32], strides = [1, 1]} : vector<5x32xf32> to vector<1x32xf32>
    %9 = vector.broadcast %8 : vector<1x32xf32> to vector<16x32xf32>
    %10 = arith.mulf %7, %9 : vector<16x32xf32>
    %11 = vector.extract_strided_slice %6 {offsets = [1, 0], sizes = [16, 32], strides = [1, 1]} : vector<20x32xf32> to vector<16x32xf32>
    %12 = vector.extract_strided_slice %1 {offsets = [1, 0], sizes = [1, 32], strides = [1, 1]} : vector<5x32xf32> to vector<1x32xf32>
    %13 = vector.broadcast %12 : vector<1x32xf32> to vector<16x32xf32>
    %14 = arith.mulf %11, %13 : vector<16x32xf32>
    %15 = arith.addf %10, %14 : vector<16x32xf32>
    %16 = vector.extract_strided_slice %6 {offsets = [2, 0], sizes = [16, 32], strides = [1, 1]} : vector<20x32xf32> to vector<16x32xf32>
    %17 = vector.extract_strided_slice %1 {offsets = [2, 0], sizes = [1, 32], strides = [1, 1]} : vector<5x32xf32> to vector<1x32xf32>
    %18 = vector.broadcast %17 : vector<1x32xf32> to vector<16x32xf32>
    %19 = arith.mulf %16, %18 : vector<16x32xf32>
    %20 = arith.addf %15, %19 : vector<16x32xf32>
    %21 = vector.extract_strided_slice %6 {offsets = [3, 0], sizes = [16, 32], strides = [1, 1]} : vector<20x32xf32> to vector<16x32xf32>
    %22 = vector.extract_strided_slice %1 {offsets = [3, 0], sizes = [1, 32], strides = [1, 1]} : vector<5x32xf32> to vector<1x32xf32>
    %23 = vector.broadcast %22 : vector<1x32xf32> to vector<16x32xf32>
    %24 = arith.mulf %21, %23 : vector<16x32xf32>
    %25 = arith.addf %20, %24 : vector<16x32xf32>
    %26 = vector.extract_strided_slice %6 {offsets = [4, 0], sizes = [16, 32], strides = [1, 1]} : vector<20x32xf32> to vector<16x32xf32>
    %27 = vector.extract_strided_slice %1 {offsets = [4, 0], sizes = [1, 32], strides = [1, 1]} : vector<5x32xf32> to vector<1x32xf32>
    %28 = vector.broadcast %27 : vector<1x32xf32> to vector<16x32xf32>
    %29 = arith.mulf %26, %28 : vector<16x32xf32>
    %30 = arith.addf %25, %29 : vector<16x32xf32>
    %c0_9 = arith.constant 0 : index
    %c0_10 = arith.constant 0 : index
    %31 = vector.load %arg5[%c0_9, %c0_10] : memref<1x32xf32, #tpu.memory_space<vmem>>, vector<1x32xf32>
    %32 = vector.broadcast %31 : vector<1x32xf32> to vector<16x32xf32>
    %33 = arith.addf %30, %32 : vector<16x32xf32>
    %34 = arith.negf %33 : vector<16x32xf32>
    %35 = math.exp %34 : vector<16x32xf32>
    %cst = arith.constant 1.000000e+00 : f32
    %36 = vector.broadcast %cst : f32 to vector<16x32xf32>
    %37 = arith.addf %36, %35 : vector<16x32xf32>
    %38 = arith.divf %36, %37 : vector<16x32xf32>
    %39 = arith.mulf %33, %38 : vector<16x32xf32>
    %c0_11 = arith.constant 0 : index
    %c0_12 = arith.constant 0 : index
    %40 = vector.load %arg6[%c0_11, %c0_12] : memref<16x32xf32, #tpu.memory_space<vmem>>, vector<16x32xf32>
    tpu.vector_store %arg6[%c0_11, %c0_12], %39 {strides = array<i32>} : memref<16x32xf32, #tpu.memory_space<vmem>>, vector<16x32xf32>,
    return
  }
  func.func @transform_0(%arg0: i32) -> (i32, i32) {
    %c0_i32 = arith.constant 0 : i32
    %c0_i32_0 = arith.constant 0 : i32
    return %arg0, %c0_i32 : i32, i32
  }
  func.func @transform_1(%arg0: i32) -> (i32, i32, i32) {
    %c0_i32 = arith.constant 0 : i32
    %c0_i32_0 = arith.constant 0 : i32
    %c0_i32_1 = arith.constant 0 : i32
    return %arg0, %c0_i32, %c0_i32_0 : i32, i32, i32
  }
  func.func @transform_2(%arg0: i32) -> (i32, i32, i32) {
    %c0_i32 = arith.constant 0 : i32
    %c0_i32_0 = arith.constant 0 : i32
    %c0_i32_1 = arith.constant 0 : i32
    return %arg0, %c0_i32, %c0_i32_0 : i32, i32, i32
  }
  func.func @transform_3(%arg0: i32) -> (i32, i32) {
    %c0_i32 = arith.constant 0 : i32
    %c0_i32_0 = arith.constant 0 : i32
    %c0_i32_1 = arith.constant 0 : i32
    return %c0_i32, %c0_i32_0 : i32, i32
  }
  func.func @transform_4(%arg0: i32) -> (i32, i32) {
    %c0_i32 = arith.constant 0 : i32
    %c0_i32_0 = arith.constant 0 : i32
    %c0_i32_1 = arith.constant 0 : i32
    return %c0_i32, %c0_i32_0 : i32, i32
  }
  func.func @transform_5(%arg0: i32) -> (i32, i32) {
    %c0_i32 = arith.constant 0 : i32
    %c0_i32_0 = arith.constant 0 : i32
    return %arg0, %c0_i32 : i32, i32
  }
}

</mosaic_0001>

<llo_original>
// kernel: tpu_custom_call.1
$region0: #{tpu_custom_call.1}
  #allocation0 [shape = 'u32[]', space=smem, size = 0x4, offset = 0x4, fixed_abs, tag = 'smem constant byte address 0x4 - core index']
  #allocation1 [shape = 'u32[144,128]{1,0:T(1,128)}', space=vmem, size = 0x12000, scoped, tag = 'internal scratch']
  %s0 = inlined_call_operand.vmem [shape: f32[64,32], index: 0, kind: input, shape index: {}]
  %s1 = inlined_call_operand.vmem [shape: f32[4,2,32], index: 1, kind: input, shape index: {}]
  %s2 = inlined_call_operand.vmem [shape: f32[4,2,32], index: 2, kind: input, shape index: {}]
  %s3 = inlined_call_operand.vmem [shape: f32[5,32], index: 3, kind: input, shape index: {}]
  %s4 = inlined_call_operand.vmem [shape: f32[1,32], index: 4, kind: input, shape index: {}]
  %s5 = inlined_call_operand.vmem [shape: f32[64,32], index: 5, kind: output, shape index: {}]
  %s6 = sld [smem:[#allocation0]]
  $region53: #{tpu_custom_call.1} parent=0
    _
  %s8 = ssub.s32 1, %s6
  %s9 = scalar_select 0, %s8, %s6
  loop: start=0, step=1, limit=6
  $region2: #{tpu_custom_call.1} parent=0 // loop_pre_header
    _
  $region3: #{tpu_custom_call.1} parent=0 // loop_header
    %s11 = sphi 0, %s15
    %p12 = scmp.ge.s32.totalorder %s11, 6
    %s21 = sphi 0, %s23
    %s24 = sphi 0, %s21
    %s25 = sphi 0, %s24
    %s41 = sphi 0, %s25
    %s47 = sphi 0, %s49
    %s50 = sphi 0, %s47
    %s51 = sphi 0, %s50
    %s67 = sphi 0, %s51
    %s73 = sphi 0, %s75
    %s76 = sphi 0, %s73
    %s77 = sphi 0, %s76
    %s93 = sphi 0, %s77
    %s97 = sphi 0, %s97
    %s99 = sphi 0, %s97
    %s100 = sphi 0, %s99
    %s114 = sphi 0, %s100
    %s118 = sphi 0, %s118
    %s120 = sphi 0, %s118
    %s121 = sphi 0, %s120
    %s135 = sphi 0, %s121
    %s141 = sphi 0, %s143
    %s144 = sphi 0, %s141
    %s145 = sphi 0, %s144
    %s161 = sphi 0, %s145
  $region4: #{tpu_custom_call.1} parent=0 // loop_header_branch
    %14 = sbr.rel (%p12) target = $region8
  $region5: #{tpu_custom_call.1} parent=0 // loop_body
    %s16 = ssub.s32 %s11, 1
    %s17 = ssub.s32 %s11, 2
    %s18 = sadd.s32 %s11, 1
    %s19 = ssub.s32 %s11, %s18
    %p20 = scmp.eq.s32.totalorder %s19, 0
    %s22 = sadd.s32 %s21, 1
    %s23 = scalar_select %p20, %s21, %s22
    %p26 = pneg %p20
    %p27 = scmp.eq.s32.totalorder %s11, 3
    %p28 = por %p26, %p27
    %p29 = scmp.ne.s32.totalorder %s21, %s24
    %p30 = scmp.eq.s32.totalorder %s11, 0
    %p31 = por %p29, %p30
    %p32 = scmp.ne.s32.totalorder %s21, %s24
    %p33 = scmp.eq.s32.totalorder %s16, 3
    %p34 = por %p32, %p33
    %p35 = scmp.ne.s32.totalorder %s24, %s25
    %p36 = scmp.eq.s32.totalorder %s16, 0
    %p37 = por %p35, %p36
    %p38 = scmp.ne.s32.totalorder %s24, %s25
    %p39 = scmp.eq.s32.totalorder %s17, 3
    %p40 = por %p38, %p39
    %p42 = scmp.ne.s32.totalorder %s25, %s41
    %p43 = scmp.eq.s32.totalorder %s17, 0
    %p44 = por %p42, %p43
    %s45 = ssub.s32 %s11, %s18
    %p46 = scmp.eq.s32.totalorder %s45, 0
    %s48 = sadd.s32 %s47, 1
    %s49 = scalar_select %p46, %s47, %s48
    %p52 = pneg %p46
    %p53 = scmp.eq.s32.totalorder %s11, 3
    %p54 = por %p52, %p53
    %p55 = scmp.ne.s32.totalorder %s47, %s50
    %p56 = scmp.eq.s32.totalorder %s11, 0
    %p57 = por %p55, %p56
    %p58 = scmp.ne.s32.totalorder %s47, %s50
    %p59 = scmp.eq.s32.totalorder %s16, 3
    %p60 = por %p58, %p59
    %p61 = scmp.ne.s32.totalorder %s50, %s51
    %p62 = scmp.eq.s32.totalorder %s16, 0
    %p63 = por %p61, %p62
    %p64 = scmp.ne.s32.totalorder %s50, %s51
    %p65 = scmp.eq.s32.totalorder %s17, 3
    %p66 = por %p64, %p65
    %p68 = scmp.ne.s32.totalorder %s51, %s67
    %p69 = scmp.eq.s32.totalorder %s17, 0
    %p70 = por %p68, %p69
    %s71 = ssub.s32 %s11, %s18
    %p72 = scmp.eq.s32.totalorder %s71, 0
    %s74 = sadd.s32 %s73, 1
    %s75 = scalar_select %p72, %s73, %s74
    %p78 = pneg %p72
    %p79 = scmp.eq.s32.totalorder %s11, 3
    %p80 = por %p78, %p79
    %p81 = scmp.ne.s32.totalorder %s73, %s76
    %p82 = scmp.eq.s32.totalorder %s11, 0
    %p83 = por %p81, %p82
    %p84 = scmp.ne.s32.totalorder %s73, %s76
    %p85 = scmp.eq.s32.totalorder %s16, 3
    %p86 = por %p84, %p85
    %p87 = scmp.ne.s32.totalorder %s76, %s77
    %p88 = scmp.eq.s32.totalorder %s16, 0
    %p89 = por %p87, %p88
    %p90 = scmp.ne.s32.totalorder %s76, %s77
    %p91 = scmp.eq.s32.totalorder %s17, 3
    %p92 = por %p90, %p91
    %p94 = scmp.ne.s32.totalorder %s77, %s93
    %p95 = scmp.eq.s32.totalorder %s17, 0
    %p96 = por %p94, %p95
    %s98 = sadd.s32 %s97, 1
    %p101 = scmp.eq.s32.totalorder %s11, 3
    %p102 = scmp.ne.s32.totalorder %s97, %s99
    %p103 = scmp.eq.s32.totalorder %s11, 0
    %p104 = por %p102, %p103
    %p105 = scmp.ne.s32.totalorder %s97, %s99
    %p106 = scmp.eq.s32.totalorder %s16, 3
    %p107 = por %p105, %p106
    %p108 = scmp.ne.s32.totalorder %s99, %s100
    %p109 = scmp.eq.s32.totalorder %s16, 0
    %p110 = por %p108, %p109
    %p111 = scmp.ne.s32.totalorder %s99, %s100
    %p112 = scmp.eq.s32.totalorder %s17, 3
    %p113 = por %p111, %p112
    %p115 = scmp.ne.s32.totalorder %s100, %s114
    %p116 = scmp.eq.s32.totalorder %s17, 0
    %p117 = por %p115, %p116
    %s119 = sadd.s32 %s118, 1
    %p122 = scmp.eq.s32.totalorder %s11, 3
    %p123 = scmp.ne.s32.totalorder %s118, %s120
    %p124 = scmp.eq.s32.totalorder %s11, 0
    %p125 = por %p123, %p124
    %p126 = scmp.ne.s32.totalorder %s118, %s120
    %p127 = scmp.eq.s32.totalorder %s16, 3
    %p128 = por %p126, %p127
    %p129 = scmp.ne.s32.totalorder %s120, %s121
    %p130 = scmp.eq.s32.totalorder %s16, 0
    %p131 = por %p129, %p130
    %p132 = scmp.ne.s32.totalorder %s120, %s121
    %p133 = scmp.eq.s32.totalorder %s17, 3
    %p134 = por %p132, %p133
    %p136 = scmp.ne.s32.totalorder %s121, %s135
    %p137 = scmp.eq.s32.totalorder %s17, 0
    %p138 = por %p136, %p137
    %s139 = ssub.s32 %s11, %s18
    %p140 = scmp.eq.s32.totalorder %s139, 0
    %s142 = sadd.s32 %s141, 1
    %s143 = scalar_select %p140, %s141, %s142
    %p146 = pneg %p140
    %p147 = scmp.eq.s32.totalorder %s11, 3
    %p148 = por %p146, %p147
    %p149 = scmp.ne.s32.totalorder %s141, %s144
    %p150 = scmp.eq.s32.totalorder %s11, 0
    %p151 = por %p149, %p150
    %p152 = scmp.ne.s32.totalorder %s141, %s144
    %p153 = scmp.eq.s32.totalorder %s16, 3
    %p154 = por %p152, %p153
    %p155 = scmp.ne.s32.totalorder %s144, %s145
    %p156 = scmp.eq.s32.totalorder %s16, 0
    %p157 = por %p155, %p156
    %p158 = scmp.ne.s32.totalorder %s144, %s145
    %p159 = scmp.eq.s32.totalorder %s17, 3
    %p160 = por %p158, %p159
    %p162 = scmp.ne.s32.totalorder %s145, %s161
    %p163 = scmp.eq.s32.totalorder %s17, 0
    %p164 = por %p162, %p163
    %p165 = scmp.le.s32.totalorder 1, %s11
    %p166 = scmp.lt.s32.totalorder %s11, 5
    %p167 = pnand %p165, %p166
    %p168 = pneg %p167
    // Predicated region
    $region9: #{tpu_custom_call.1} parent=5 // pred_check
      _
    $region10: #{tpu_custom_call.1} parent=5 // pred_check_branch
      %170 = sbr.rel (%p167) target = $region12
    $region11: #{tpu_custom_call.1} parent=5 // pred_region
      %s171 = ssub.s32 %s11, 1
      // Predicated region
      $region13: #{tpu_custom_call.1} parent=11 // pred_check
        %p172 = pneg %p110
      $region14: #{tpu_custom_call.1} parent=11 // pred_check_branch
        %174 = sbr.rel (%p172) target = $region16
      $region15: #{tpu_custom_call.1} parent=11 // pred_region
        _
      $region16: #{tpu_custom_call.1} parent=11 // pred_fallthru
        _
      // Predicated region
      $region17: #{tpu_custom_call.1} parent=11 // pred_check
        %p175 = pneg %p131
      $region18: #{tpu_custom_call.1} parent=11 // pred_check_branch
        %177 = sbr.rel (%p175) target = $region20
      $region19: #{tpu_custom_call.1} parent=11 // pred_region
        _
      $region20: #{tpu_custom_call.1} parent=11 // pred_fallthru
        _
    $region12: #{tpu_custom_call.1} parent=5 // pred_fallthru
      _
    %p178 = scmp.lt.s32.totalorder %s11, 4
    // Predicated region
    $region21: #{tpu_custom_call.1} parent=5 // pred_check
      %p179 = pneg %p178
    $region22: #{tpu_custom_call.1} parent=5 // pred_check_branch
      %181 = sbr.rel (%p179) target = $region24
    $region23: #{tpu_custom_call.1} parent=5 // pred_region
      // Predicated region
      $region25: #{tpu_custom_call.1} parent=23 // pred_check
        %p182 = pneg %p31
      $region26: #{tpu_custom_call.1} parent=23 // pred_check_branch
        %184 = sbr.rel (%p182) target = $region28
      $region27: #{tpu_custom_call.1} parent=23 // pred_region
        %s185 = smul.u32 2, %s11
        %p186 = scmp.lt.s32.totalorder %s185, 7
        %s187 = scalar_select %p186, %s185, 7
        %s188 = smul.addr %s187, 8
        %s189 = scalar_lea.vmem %s0, %s188
        %s190 = smul.u32 2, %s11
      $region28: #{tpu_custom_call.1} parent=23 // pred_fallthru
        _
      // Predicated region
      $region29: #{tpu_custom_call.1} parent=23 // pred_check
        %p191 = pneg %p57
      $region30: #{tpu_custom_call.1} parent=23 // pred_check_branch
        %193 = sbr.rel (%p191) target = $region32
      $region31: #{tpu_custom_call.1} parent=23 // pred_region
        %p194 = scmp.lt.s32.totalorder %s11, 3
        %s195 = scalar_select %p194, %s11, 3
        %s196 = smul.addr %s195, 2
        %s197 = scalar_lea.vmem %s1, %s196
      $region32: #{tpu_custom_call.1} parent=23 // pred_fallthru
        _
      // Predicated region
      $region33: #{tpu_custom_call.1} parent=23 // pred_check
        %p198 = pneg %p83
      $region34: #{tpu_custom_call.1} parent=23 // pred_check_branch
        %200 = sbr.rel (%p198) target = $region36
      $region35: #{tpu_custom_call.1} parent=23 // pred_region
        %p201 = scmp.lt.s32.totalorder %s11, 3
        %s202 = scalar_select %p201, %s11, 3
        %s203 = smul.addr %s202, 2
        %s204 = scalar_lea.vmem %s2, %s203
      $region36: #{tpu_custom_call.1} parent=23 // pred_fallthru
        _
    $region24: #{tpu_custom_call.1} parent=5 // pred_fallthru
      _
    %p205 = scmp.le.s32.totalorder 1, %s11
    %p206 = scmp.lt.s32.totalorder %s11, 5
    %p207 = pnand %p205, %p206
    %p208 = pneg %p207
    // Predicated region
    $region37: #{tpu_custom_call.1} parent=5 // pred_check
      _
    $region38: #{tpu_custom_call.1} parent=5 // pred_check_branch
      %210 = sbr.rel (%p207) target = $region40
    $region39: #{tpu_custom_call.1} parent=5 // pred_region
      %s211 = ssub.s32 %s11, 1
      %s212 = smul.u32 2, %s16
      %p213 = scmp.lt.s32.totalorder %s212, 7
      %s214 = scalar_select %p213, %s212, 7
      %s215 = smul.addr %s214, 8
      %s216 = scalar_lea.vmem %s0, %s215
      %p217 = pneg %p37
      %p218 = pneg %p34
      %p219 = scmp.lt.s32.totalorder %s16, 3
      %s220 = scalar_select %p219, %s16, 3
      %s221 = smul.addr %s220, 2
      %s222 = scalar_lea.vmem %s1, %s221
      %p223 = pneg %p63
      %p224 = pneg %p60
      %p225 = scmp.lt.s32.totalorder %s16, 3
      %s226 = scalar_select %p225, %s16, 3
      %s227 = smul.addr %s226, 2
      %s228 = scalar_lea.vmem %s2, %s227
      %p229 = pneg %p89
      %p230 = pneg %p86
      %p231 = pneg %p110
      %p232 = pneg %p107
      %p233 = pneg %p131
      %p234 = pneg %p128
      %p235 = pneg %p157
      %p236 = pneg %p154
      %s237 = smul.u32 2, %s16
      %p238 = scmp.lt.s32.totalorder %s237, 7
      %s239 = scalar_select %p238, %s237, 7
      %s240 = smul.addr %s239, 8
      %s241 = scalar_lea.vmem %s5, %s240
      %s242 = smul.u32 2, %s16
      %p243 = scmp.lt.s32.totalorder %s242, 7
      %s244 = scalar_select %p243, %s242, 7
      %s245 = smul.addr %s244, 8
      %s246 = scalar_lea.vmem %s0, %s245
      %s247 = smul.u32 2, %s16
      %p248 = scmp.lt.s32.totalorder %s16, 3
      %s249 = scalar_select %p248, %s16, 3
      %s250 = smul.addr %s249, 2
      %s251 = scalar_lea.vmem %s1, %s250
      %p252 = scmp.lt.s32.totalorder %s16, 3
      %s253 = scalar_select %p252, %s16, 3
      %s254 = smul.addr %s253, 2
      %s255 = scalar_lea.vmem %s2, %s254
      %s256 = smul.u32 2, %s16
      %p257 = scmp.lt.s32.totalorder %s256, 7
      %s258 = scalar_select %p257, %s256, 7
      %s259 = smul.addr %s258, 8
      %s260 = scalar_lea.vmem %s5, %s259
      %s261 = smul.u32 2, %s16
      %v262 = vld [vmem:[%s246] sm:$0xff]
      %v263 = vld [vmem:[%s246 + $0x8] sm:$0xff]
      %v264 = vld [vmem:[%s3] sm:$0x1f]
      %v265 = vld [vmem:[%s251] sm:$0x3]
      %v266 = vld [vmem:[%s255] sm:$0x3]
      %vm269 = vcmask 1041408
      %v270 = vrot.slane %v262, 6
      %v271 = vrot.slane %v263, 6
      %v272 = vsel %vm269, %v270, %v271
      %v277 = vrot.slane %v266, 6
      %v279 = vsel %vm269, %v265, %v270
      %v280 = vsel %vm269, %v271, %v277
      %v281 = vlaneseq
      %v282 = vshrl.u32 %v281, 7
      %v283 = vsub.s32 0, %v282
      %v284 = vrot.slane %v264, %v283
      %v285 = vmul.f32 %v279, %v284
      %v286 = vmul.f32 %v272, %v284
      %v287 = vlaneseq
      %v288 = vshrl.u32 %v287, 7
      %v289 = vsub.s32 1, %v288
      %v290 = vrot.slane %v264, %v289
      %v291 = vmul.f32 %v279, %v290
      %v292 = vmul.f32 %v272, %v290
      %v293 = vmul.f32 %v280, %v290
      %vm297 = vcmask 1046528
      %v298 = vrot.slane %v291, 1
      %v299 = vrot.slane %v292, 1
      %v300 = vsel %vm297, %v298, %v299
      %v301 = vrot.slane %v293, 1
      %v302 = vsel %vm297, %v299, %v301
      %v305 = vadd.f32 %v285, %v300
      %v306 = vadd.f32 %v286, %v302
      %v307 = vlaneseq
      %v308 = vshrl.u32 %v307, 7
      %v309 = vsub.s32 2, %v308
      %v310 = vrot.slane %v264, %v309
      %v311 = vmul.f32 %v279, %v310
      %v312 = vmul.f32 %v272, %v310
      %v313 = vmul.f32 %v280, %v310
      %vm317 = vcmask 1045504
      %v318 = vrot.slane %v311, 2
      %v319 = vrot.slane %v312, 2
      %v320 = vsel %vm317, %v318, %v319
      %v321 = vrot.slane %v313, 2
      %v322 = vsel %vm317, %v319, %v321
      %v325 = vadd.f32 %v305, %v320
      %v326 = vadd.f32 %v306, %v322
      %v327 = vlaneseq
      %v328 = vshrl.u32 %v327, 7
      %v329 = vsub.s32 3, %v328
      %v330 = vrot.slane %v264, %v329
      %v331 = vmul.f32 %v279, %v330
      %v332 = vmul.f32 %v272, %v330
      %v333 = vmul.f32 %v280, %v330
      %vm337 = vcmask 1044480
      %v338 = vrot.slane %v331, 3
      %v339 = vrot.slane %v332, 3
      %v340 = vsel %vm337, %v338, %v339
      %v341 = vrot.slane %v333, 3
      %v342 = vsel %vm337, %v339, %v341
      %v345 = vadd.f32 %v325, %v340
      %v346 = vadd.f32 %v326, %v342
      %v347 = vlaneseq
      %v348 = vshrl.u32 %v347, 7
      %v349 = vsub.s32 4, %v348
      %v350 = vrot.slane %v264, %v349
      %v351 = vmul.f32 %v279, %v350
      %v352 = vmul.f32 %v272, %v350
      %v353 = vmul.f32 %v280, %v350
      %vm357 = vcmask 1043456
      %v358 = vrot.slane %v351, 4
      %v359 = vrot.slane %v352, 4
      %v360 = vsel %vm357, %v358, %v359
      %v361 = vrot.slane %v353, 4
      %v362 = vsel %vm357, %v359, %v361
      %v365 = vadd.f32 %v345, %v360
      %v366 = vadd.f32 %v346, %v362
      %v367 = vld [vmem:[%s4] sm:$0x1]
      %v369 = vlaneseq
      %v370 = vshrl.u32 %v369, 7
      %v371 = vsub.s32 0, %v370
      %v372 = vrot.slane %v367, %v371
      %v374 = vadd.f32 %v365, %v372
      %v375 = vadd.f32 %v366, %v372
      %v376 = vxor.u32 %v374, 2147483648
      %v377 = vxor.u32 %v375, 2147483648
      %v378 = vmul.f32 %v376, 1.442695
      %v379 = vpow.pop %v378
      %v380 = vmul.f32 %v377, 1.442695
      %v381 = vpow.pop %v380
      %v382 = vadd.f32 %v379, 1.0
      %v383 = vadd.f32 %v381, 1.0
      %v384 = vrcp.pop %v382
      %v385 = vmul.f32 1.0, %v384
      %v386 = vrcp.pop %v383
      %v387 = vmul.f32 1.0, %v386
      %v388 = vmul.f32 %v374, %v385
      %v389 = vmul.f32 %v375, %v387
      %vm390 = vcmask 261120
      %391 = vst.msk [vmem:[%s260] sm:$0xff] %vm390, %v388
      %392 = vst.msk [vmem:[%s260 + $0x8] sm:$0xff] %vm390, %v389
      %s393 = smul.u32 2, %s16
      %p394 = scmp.lt.s32.totalorder %s393, 7
      %s395 = scalar_select %p394, %s393, 7
      %s396 = smul.addr %s395, 8
      %s397 = scalar_lea.vmem %s5, %s396
      // Predicated region
      $region41: #{tpu_custom_call.1} parent=39 // pred_check
        %p398 = pneg %p154
      $region42: #{tpu_custom_call.1} parent=39 // pred_check_branch
        %400 = sbr.rel (%p398) target = $region44
      $region43: #{tpu_custom_call.1} parent=39 // pred_region
        %s401 = smul.u32 2, %s16
      $region44: #{tpu_custom_call.1} parent=39 // pred_fallthru
        _
    $region40: #{tpu_custom_call.1} parent=5 // pred_fallthru
      _
    %p402 = scmp.le.s32.totalorder 2, %s11
    // Predicated region
    $region45: #{tpu_custom_call.1} parent=5 // pred_check
      %p403 = pneg %p402
    $region46: #{tpu_custom_call.1} parent=5 // pred_check_branch
      %405 = sbr.rel (%p403) target = $region48
    $region47: #{tpu_custom_call.1} parent=5 // pred_region
      %s406 = ssub.s32 %s11, 2
      // Predicated region
      $region49: #{tpu_custom_call.1} parent=47 // pred_check
        %p407 = pneg %p160
      $region50: #{tpu_custom_call.1} parent=47 // pred_check_branch
        %409 = sbr.rel (%p407) target = $region52
      $region51: #{tpu_custom_call.1} parent=47 // pred_region
        %s410 = smul.u32 2, %s17
        %p411 = scmp.lt.s32.totalorder %s410, 7
        %s412 = scalar_select %p411, %s410, 7
        %s413 = smul.addr %s412, 8
        %s414 = scalar_lea.vmem %s5, %s413
      $region52: #{tpu_custom_call.1} parent=47 // pred_fallthru
        _
    $region48: #{tpu_custom_call.1} parent=5 // pred_fallthru
      _
  $region6: #{tpu_custom_call.1} parent=0 // loop_footer
    %s15 = sadd.s32 1, %s11
  $region7: #{tpu_custom_call.1} parent=0 // loop_footer_branch
    %10 = sbr.rel target = $region3
  $region8: #{tpu_custom_call.1} parent=0 // loop_exit
    _

</llo_original>
